<compile_context>
chip_gen: v5e
topology: v5e:2x2
jax: 0.10.0
libtpu: 0.0.40
codegen_flags: <defaults>
</compile_context>

<pallas_src>
from functools import partial

import jax
import jax.numpy as jnp
from jax.experimental import pallas as pl
from jax.experimental.pallas import tpu as pltpu

LANE = 128  # TPU lane width


def _round_up(x, m):
    return ((x + m - 1) // m) * m


def _pick_tb(B, block_b):
    """Batch tile size: a multiple of 128 (keeps every block shape legal and the
    transposed output store lane-dense), capped so large batches get >= 2 blocks
    (feeds both TensorCores on v7x via the 'parallel' grid axis)."""
    tb = min(_round_up(block_b, LANE), _round_up(B, LANE))
    if B >= 2 * LANE and pl.cdiv(B, tb) < 2:
        tb = _round_up(pl.cdiv(B, 2), LANE)
    return tb


def dqn_kernel(x_ref, w1_ref, b1_ref, w2_ref, b2_ref, w3_ref, b3_ref, ot_ref):
    """One batch tile of the MLP, all f32: three MXU matmuls + bias + ReLU,
    with the final Q tile stored transposed (out_rows x batch) for a small,
    lane-dense HBM writeback."""
    x = x_ref[...]                                                     # (TB, F) f32
    # fc1 + ReLU
    h1 = jnp.dot(x, w1_ref[...], preferred_element_type=jnp.float32) + b1_ref[...]
    h1 = jnp.maximum(h1, 0.0)
    # fc2 + ReLU
    h2 = jnp.dot(h1, w2_ref[...], preferred_element_type=jnp.float32) + b2_ref[...]
    h2 = jnp.maximum(h2, 0.0)
    # fc3 (no activation); w3 is padded to 128 columns (lane-dense MXU tile)
    q = jnp.dot(h2, w3_ref[...], preferred_element_type=jnp.float32) + b3_ref[...]  # (TB, 128)
    qt = q.T                                                           # (128, TB) — XLU transpose
    ot_ref[...] = qt[: ot_ref.shape[0], :]                             # (OUT8, TB) store


def prepare_params(w1, b1, w2, b2, w3, b3):
    """One-time parameter prep: zero-pad fc3 to a lane-dense 128-column tile.
    Do this once at init, NOT per forward call."""
    H, out_size = w3.shape
    op = _round_up(out_size, LANE)
    w3p = jnp.zeros((H, op), jnp.float32).at[:, :out_size].set(w3.astype(jnp.float32))
    b3p = jnp.zeros((1, op), jnp.float32).at[:, :out_size].set(b3.astype(jnp.float32))
    return (
        w1.astype(jnp.float32),
        b1.astype(jnp.float32),
        w2.astype(jnp.float32),
        b2.astype(jnp.float32),
        w3p,
        b3p,
    )


@partial(jax.jit, static_argnames=("out_size", "block_b"))
def dqn_forward(x, w1, b1, w2, b2, w3p, b3p, *, out_size, block_b=512):
    """Batch-tiled DQN forward.

    x:   (B, F) float32
    w1:  (F, H), w2: (H, H), w3p: (H, 128-padded)    biases: (1, cols)
    Returns (B, out_size) float32.
    """
    B, F = x.shape
    H = w1.shape[1]
    OP = w3p.shape[1]                      # padded fc3 columns (multiple of 128)
    OUT8 = _round_up(out_size, 8)          # sublane-rounded true output rows

    tb = _pick_tb(B, block_b)
    num_blocks = pl.cdiv(B, tb)            # ragged B handled by boundary masking

    flops = 2 * B * (F * H + H * H + H * out_size)
    bytes_accessed = 4 * (
        B * F                               # x read
        + F * H + H + H * H + H             # fc1/fc2 weights + biases
        + H * out_size + out_size           # fc3 (true columns)
        + B * out_size                      # output write
    )

    out_t = pl.pallas_call(
        dqn_kernel,
        out_shape=jax.ShapeDtypeStruct((OUT8, B), jnp.float32),
        grid_spec=pltpu.PrefetchScalarGridSpec(
            num_scalar_prefetch=0,
            grid=(num_blocks,),
            in_specs=[
                pl.BlockSpec((tb, F), lambda i: (i, 0)),        # x: tiled over batch
                pl.BlockSpec((F, H), lambda i: (0, 0)),         # w1: resident in VMEM
                pl.BlockSpec((1, H), lambda i: (0, 0)),         # b1: resident
                pl.BlockSpec((H, H), lambda i: (0, 0)),         # w2: resident
                pl.BlockSpec((1, H), lambda i: (0, 0)),         # b2: resident
                pl.BlockSpec((H, OP), lambda i: (0, 0)),        # w3 (128-padded): resident
                pl.BlockSpec((1, OP), lambda i: (0, 0)),        # b3 (128-padded): resident
            ],
            out_specs=pl.BlockSpec((OUT8, tb), lambda i: (0, i)),  # transposed, lane-dense
        ),
        compiler_params=pltpu.CompilerParams(
            dimension_semantics=("parallel",),
            vmem_limit_bytes=32 * 1024 * 1024,  # far above actual use; safe on v5e/v6e/v7x
        ),
        cost_estimate=pl.CostEstimate(
            flops=flops, transcendentals=0, bytes_accessed=bytes_accessed
        ),
    )(x, w1, b1, w2, b2, w3p, b3p)

    # Tiny (out_size, B) -> (B, out_size) fixup; fuses under jit.
    return out_t[:out_size, :].T


def init_linear_params(key, in_features, out_features):
    """Deterministic init mimicking PyTorch nn.Linear default:
    U(-1/sqrt(in), 1/sqrt(in)) for weight and bias. Stored as [in, out]."""
    k_w, k_b = jax.random.split(key)
    bound = 1.0 / jnp.sqrt(jnp.float32(in_features))
    w = jax.random.uniform(k_w, (in_features, out_features), jnp.float32, -bound, bound)
    b = jax.random.uniform(k_b, (1, out_features), jnp.float32, -bound, bound)
    return w, b


def reference_forward(x, w1, b1, w2, b2, w3, b3):
    h1 = jnp.maximum(x @ w1 + b1, 0.0)
    h2 = jnp.maximum(h1 @ w2 + b2, 0.0)
    return h2 @ w3 + b3


if __name__ == "__main__":
    # Shapes consistent with DQNNetwork(input_size=32, output_size=8, hidden_size=128)
    input_size = 32
    hidden_size = 128
    output_size = 8

    key = jax.random.PRNGKey(0)
    k1, k2, k3, kx, kx2 = jax.random.split(key, 5)

    w1, b1 = init_linear_params(k1, input_size, hidden_size)
    w2, b2 = init_linear_params(k2, hidden_size, hidden_size)
    w3, b3 = init_linear_params(k3, hidden_size, output_size)

    # One-time parameter prep (fc3 padding) — hoisted out of the forward path.
    params = prepare_params(w1, b1, w2, b2, w3, b3)

    # --- small online-acting batch ---
    batch = 8
    x = jax.random.normal(kx, (batch, input_size), jnp.float32)
    out = jax.block_until_ready(dqn_forward(x, *params, out_size=output_size))
    assert out.shape == (batch, output_size)
    ref = reference_forward(x, w1, b1, w2, b2, w3, b3)
    assert jnp.allclose(out, ref, atol=2e-2, rtol=2e-2), "mismatch vs reference (B=8)"

    # --- replay-buffer-sized batch (ragged, multi-block grid, no wrapper pad) ---
    batch2 = 300  # deliberately not a multiple of the tile
    x2 = jax.random.normal(kx2, (batch2, input_size), jnp.float32)
    out2 = jax.block_until_ready(dqn_forward(x2, *params, out_size=output_size))
    assert out2.shape == (batch2, output_size)
    ref2 = reference_forward(x2, w1, b1, w2, b2, w3, b3)
    assert jnp.allclose(out2, ref2, atol=2e-2, rtol=2e-2), "mismatch vs reference (B=300)"

    print("KERNEL_OK")
</pallas_src>

<mosaic_0001>
module attributes {stable_mosaic.version = 11 : i64} {
  func.func @dqn_kernel(%arg0: i32, %arg1: memref<128x32xf32, #tpu.memory_space<vmem>>, %arg2: memref<32x128xf32, #tpu.memory_space<vmem>>, %arg3: memref<1x128xf32, #tpu.memory_space<vmem>>, %arg4: memref<128x128xf32, #tpu.memory_space<vmem>>, %arg5: memref<1x128xf32, #tpu.memory_space<vmem>>, %arg6: memref<128x128xf32, #tpu.memory_space<vmem>>, %arg7: memref<1x128xf32, #tpu.memory_space<vmem>>, %arg8: memref<8x128xf32, #tpu.memory_space<vmem>>) attributes {dimension_semantics = [#tpu.dimension_semantics<parallel>], iteration_bounds = array<i64: 1>, scalar_prefetch = 0 : i64, scratch_operands = 0 : i64, tpu.core_type = #tpu.core_type<tc>, window_params = [{transform_indices = @transform_0, window_bounds = array<i64: 128, 32>}, {pipeline_mode = #tpu.pipeline_mode<synchronous>, transform_indices = @transform_1, window_bounds = array<i64: 32, 128>}, {pipeline_mode = #tpu.pipeline_mode<synchronous>, transform_indices = @transform_2, window_bounds = array<i64: 1, 128>}, {pipeline_mode = #tpu.pipeline_mode<synchronous>, transform_indices = @transform_3, window_bounds = array<i64: 128, 128>}, {pipeline_mode = #tpu.pipeline_mode<synchronous>, transform_indices = @transform_4, window_bounds = array<i64: 1, 128>}, {pipeline_mode = #tpu.pipeline_mode<synchronous>, transform_indices = @transform_5, window_bounds = array<i64: 128, 128>}, {pipeline_mode = #tpu.pipeline_mode<synchronous>, transform_indices = @transform_6, window_bounds = array<i64: 1, 128>}, {transform_indices = @transform_7, window_bounds = array<i64: 8, 128>}]} {
    %c0 = arith.constant 0 : index
    %c0_0 = arith.constant 0 : index
    %0 = vector.load %arg1[%c0, %c0_0] : memref<128x32xf32, #tpu.memory_space<vmem>>, vector<128x32xf32>
    %c0_1 = arith.constant 0 : index
    %c0_2 = arith.constant 0 : index
    %1 = vector.load %arg2[%c0_1, %c0_2] : memref<32x128xf32, #tpu.memory_space<vmem>>, vector<32x128xf32>
    %cst = arith.constant dense<0.000000e+00> : vector<128x128xf32>
    %2 = tpu.matmul %0, %1, %cst {dimension_numbers = #tpu.dot_dimension_numbers<[1], [0], [0], [1], [0, 0, 1, 1], [], []>} : vector<128x32xf32>, vector<32x128xf32>, vector<128x128xf32> -> vector<128x128xf32>
    %c0_3 = arith.constant 0 : index
    %c0_4 = arith.constant 0 : index
    %3 = vector.load %arg3[%c0_3, %c0_4] : memref<1x128xf32, #tpu.memory_space<vmem>>, vector<1x128xf32>
    %4 = vector.broadcast %3 : vector<1x128xf32> to vector<128x128xf32>
    %5 = arith.addf %2, %4 : vector<128x128xf32>
    %cst_5 = arith.constant 0.000000e+00 : f32
    %6 = vector.broadcast %cst_5 : f32 to vector<128x128xf32>
    %7 = arith.maximumf %5, %6 : vector<128x128xf32>
    %c0_6 = arith.constant 0 : index
    %c0_7 = arith.constant 0 : index
    %8 = vector.load %arg4[%c0_6, %c0_7] : memref<128x128xf32, #tpu.memory_space<vmem>>, vector<128x128xf32>
    %cst_8 = arith.constant dense<0.000000e+00> : vector<128x128xf32>
    %9 = tpu.matmul %7, %8, %cst_8 {dimension_numbers = #tpu.dot_dimension_numbers<[1], [0], [0], [1], [0, 0, 1, 1], [], []>} : vector<128x128xf32>, vector<128x128xf32>, vector<128x128xf32> -> vector<128x128xf32>
    %c0_9 = arith.constant 0 : index
    %c0_10 = arith.constant 0 : index
    %10 = vector.load %arg5[%c0_9, %c0_10] : memref<1x128xf32, #tpu.memory_space<vmem>>, vector<1x128xf32>
    %11 = vector.broadcast %10 : vector<1x128xf32> to vector<128x128xf32>
    %12 = arith.addf %9, %11 : vector<128x128xf32>
    %cst_11 = arith.constant 0.000000e+00 : f32
    %13 = vector.broadcast %cst_11 : f32 to vector<128x128xf32>
    %14 = arith.maximumf %12, %13 : vector<128x128xf32>
    %c0_12 = arith.constant 0 : index
    %c0_13 = arith.constant 0 : index
    %15 = vector.load %arg6[%c0_12, %c0_13] : memref<128x128xf32, #tpu.memory_space<vmem>>, vector<128x128xf32>
    %cst_14 = arith.constant dense<0.000000e+00> : vector<128x128xf32>
    %16 = tpu.matmul %14, %15, %cst_14 {dimension_numbers = #tpu.dot_dimension_numbers<[1], [0], [0], [1], [0, 0, 1, 1], [], []>} : vector<128x128xf32>, vector<128x128xf32>, vector<128x128xf32> -> vector<128x128xf32>
    %c0_15 = arith.constant 0 : index
    %c0_16 = arith.constant 0 : index
    %17 = vector.load %arg7[%c0_15, %c0_16] : memref<1x128xf32, #tpu.memory_space<vmem>>, vector<1x128xf32>
    %18 = vector.broadcast %17 : vector<1x128xf32> to vector<128x128xf32>
    %19 = arith.addf %16, %18 : vector<128x128xf32>
    %20 = tpu.transpose %19, [1, 0] : vector<128x128xf32> -> vector<128x128xf32>
    %21 = vector.extract_strided_slice %20 {offsets = [0, 0], sizes = [8, 128], strides = [1, 1]} : vector<128x128xf32> to vector<8x128xf32>
    %c0_17 = arith.constant 0 : index
    %c0_18 = arith.constant 0 : index
    %22 = vector.load %arg8[%c0_17, %c0_18] : memref<8x128xf32, #tpu.memory_space<vmem>>, vector<8x128xf32>
    tpu.vector_store %arg8[%c0_17, %c0_18], %21 {strides = array<i32>} : memref<8x128xf32, #tpu.memory_space<vmem>>, vector<8x128xf32>,
    return
  }
  func.func @transform_0(%arg0: i32) -> (i32, i32) {
    %c0_i32 = arith.constant 0 : i32
    %c0_i32_0 = arith.constant 0 : i32
    return %arg0, %c0_i32 : i32, i32
  }
  func.func @transform_1(%arg0: i32) -> (i32, i32) {
    %c0_i32 = arith.constant 0 : i32
    %c0_i32_0 = arith.constant 0 : i32
    %c0_i32_1 = arith.constant 0 : i32
    return %c0_i32, %c0_i32_0 : i32, i32
  }
  func.func @transform_2(%arg0: i32) -> (i32, i32) {
    %c0_i32 = arith.constant 0 : i32
    %c0_i32_0 = arith.constant 0 : i32
    %c0_i32_1 = arith.constant 0 : i32
    return %c0_i32, %c0_i32_0 : i32, i32
  }
  func.func @transform_3(%arg0: i32) -> (i32, i32) {
    %c0_i32 = arith.constant 0 : i32
    %c0_i32_0 = arith.constant 0 : i32
    %c0_i32_1 = arith.constant 0 : i32
    return %c0_i32, %c0_i32_0 : i32, i32
  }
  func.func @transform_4(%arg0: i32) -> (i32, i32) {
    %c0_i32 = arith.constant 0 : i32
    %c0_i32_0 = arith.constant 0 : i32
    %c0_i32_1 = arith.constant 0 : i32
    return %c0_i32, %c0_i32_0 : i32, i32
  }
  func.func @transform_5(%arg0: i32) -> (i32, i32) {
    %c0_i32 = arith.constant 0 : i32
    %c0_i32_0 = arith.constant 0 : i32
    %c0_i32_1 = arith.constant 0 : i32
    return %c0_i32, %c0_i32_0 : i32, i32
  }
  func.func @transform_6(%arg0: i32) -> (i32, i32) {
    %c0_i32 = arith.constant 0 : i32
    %c0_i32_0 = arith.constant 0 : i32
    %c0_i32_1 = arith.constant 0 : i32
    return %c0_i32, %c0_i32_0 : i32, i32
  }
  func.func @transform_7(%arg0: i32) -> (i32, i32) {
    %c0_i32 = arith.constant 0 : i32
    %c0_i32_0 = arith.constant 0 : i32
    return %c0_i32, %arg0 : i32, i32
  }
}

</mosaic_0001>

<llo_original>
// kernel: dqn_forward.1
$region0: #{dqn_forward.1}
  #allocation0 [shape = 'u32[]', space=smem, size = 0x4, offset = 0x4, fixed_abs, tag = 'smem constant byte address 0x4 - core index']
  #allocation1 [shape = 'u32[72,128]{1,0:T(1,128)}', space=vmem, size = 0x9000, scoped, tag = 'internal scratch']
  %s0 = inlined_call_operand.hbm [shape: f32[8,32], index: 0, kind: input, shape index: {}]
  %s1 = inlined_call_operand.hbm [shape: f32[32,128], index: 1, kind: input, shape index: {}]
  %s2 = inlined_call_operand.vmem [shape: f32[1,128], index: 2, kind: input, shape index: {}]
  %s3 = inlined_call_operand.hbm [shape: f32[128,128], index: 3, kind: input, shape index: {}]
  %s4 = inlined_call_operand.vmem [shape: f32[1,128], index: 4, kind: input, shape index: {}]
  %s5 = inlined_call_operand.hbm [shape: f32[128,128], index: 5, kind: input, shape index: {}]
  %s6 = inlined_call_operand.vmem [shape: f32[1,128], index: 6, kind: input, shape index: {}]
  %s7 = inlined_call_operand.vmem [shape: f32[8,8], index: 7, kind: output, shape index: {}]
  %s8 = sld [smem:[#allocation0]]
  $region54: #{dqn_forward.1} parent=0
    _
  %s10 = ssub.s32 1, %s8
  %s11 = scalar_select 0, %s10, %s8
  $region1: #{dqn_forward.1} parent=0
    #allocation2 [shape = 'u8[65536]{0}', space=vmem, size = 0x10000, scoped, tag = 'input window, operand 0, single buffered']
    #allocation3 [shape = 's32[1]{0}', space=sflag, size = 0x4, scoped, tag = 'scoped memory for dqn_forward.1']
    #allocation4 [shape = 'u8[16384]{0}', space=vmem, size = 0x4000, scoped, tag = 'input window, operand 1, single buffered']
    #allocation5 [shape = 's32[1]{0}', space=sflag, size = 0x4, scoped, tag = 'scoped memory for dqn_forward.1']
    #allocation6 [shape = 'u8[65536]{0}', space=vmem, size = 0x10000, scoped, tag = 'input window, operand 3, single buffered']
    #allocation7 [shape = 'u8[65536]{0}', space=vmem, size = 0x10000, scoped, tag = 'input window, operand 5, single buffered']
    #allocation8 [shape = 's32[1]{0}', space=sflag, size = 0x4, scoped, tag = 'scoped memory for dqn_forward.1']
    %12 = vsyncpa [#allocation3], 0
    %13 = vsyncpa [#allocation5], 0
    %14 = vsyncpa [#allocation8], 0
    // Predicated region
    $region2: #{dqn_forward.1} parent=1 // pred_check
      _
    $region3: #{dqn_forward.1} parent=1 // pred_check_branch
      %16 = sbr.rel (0) target = $region5
    $region4: #{dqn_forward.1} parent=1 // pred_region
      %18 = vsyncadd [#allocation3], 1920
      %s19 = sshll.u32 %s0, 4
      %s20 = int_to_ptr.hbm [resolvable:$true] %s19
      %s21 = sshll.u32 [#allocation2], 4
      %s22 = int_to_ptr.vmem [resolvable:$true] %s21
      %27 = dma.hbm_to_vmem [thread:$0]  %s20, 128, %s22, [#allocation3], 128, 128, 8
    $region5: #{dqn_forward.1} parent=1 // pred_fallthru
      _
    // Predicated region
    $region6: #{dqn_forward.1} parent=1 // pred_check
      _
    $region7: #{dqn_forward.1} parent=1 // pred_check_branch
      %29 = sbr.rel (0) target = $region9
    $region8: #{dqn_forward.1} parent=1 // pred_region
      %31 = vsyncadd [#allocation5], 0
      %s32 = sshll.u32 %s1, 4
      %s33 = int_to_ptr.hbm [resolvable:$true] %s32
      %s34 = sshll.u32 [#allocation4], 4
      %s35 = int_to_ptr.vmem [resolvable:$true] %s34
      %40 = dma.hbm_to_vmem [thread:$0]  %s33, 512, %s35, [#allocation5], 128, 128, 8
    $region9: #{dqn_forward.1} parent=1 // pred_fallthru
      _
    // Predicated region
    $region10: #{dqn_forward.1} parent=1 // pred_check
      _
    $region11: #{dqn_forward.1} parent=1 // pred_check_branch
      %42 = sbr.rel (0) target = $region13
    $region12: #{dqn_forward.1} parent=1 // pred_region
      _
    $region13: #{dqn_forward.1} parent=1 // pred_fallthru
      _
    // Predicated region
    $region14: #{dqn_forward.1} parent=1 // pred_check
      _
    $region15: #{dqn_forward.1} parent=1 // pred_check_branch
      %44 = sbr.rel (0) target = $region17
    $region16: #{dqn_forward.1} parent=1 // pred_region
      %46 = vsyncadd [#allocation5], 0
      %s47 = sshll.u32 %s3, 4
      %s48 = int_to_ptr.hbm [resolvable:$true] %s47
      %s49 = sshll.u32 [#allocation6], 4
      %s50 = int_to_ptr.vmem [resolvable:$true] %s49
      %55 = dma.hbm_to_vmem [thread:$0]  %s48, 2048, %s50, [#allocation5], 128, 128, 8
    $region17: #{dqn_forward.1} parent=1 // pred_fallthru
      _
    // Predicated region
    $region18: #{dqn_forward.1} parent=1 // pred_check
      _
    $region19: #{dqn_forward.1} parent=1 // pred_check_branch
      %57 = sbr.rel (0) target = $region21
    $region20: #{dqn_forward.1} parent=1 // pred_region
      _
    $region21: #{dqn_forward.1} parent=1 // pred_fallthru
      _
    // Predicated region
    $region22: #{dqn_forward.1} parent=1 // pred_check
      _
    $region23: #{dqn_forward.1} parent=1 // pred_check_branch
      %59 = sbr.rel (0) target = $region25
    $region24: #{dqn_forward.1} parent=1 // pred_region
      %61 = vsyncadd [#allocation8], 0
      %s62 = sshll.u32 %s5, 4
      %s63 = int_to_ptr.hbm [resolvable:$true] %s62
      %s64 = sshll.u32 [#allocation7], 4
      %s65 = int_to_ptr.vmem [resolvable:$true] %s64
      %70 = dma.hbm_to_vmem [thread:$0]  %s63, 2048, %s65, [#allocation8], 128, 128, 8
    $region25: #{dqn_forward.1} parent=1 // pred_fallthru
      _
    // Predicated region
    $region26: #{dqn_forward.1} parent=1 // pred_check
      _
    $region27: #{dqn_forward.1} parent=1 // pred_check_branch
      %72 = sbr.rel (0) target = $region29
    $region28: #{dqn_forward.1} parent=1 // pred_region
      _
    $region29: #{dqn_forward.1} parent=1 // pred_fallthru
      _
    // Predicated region
    $region30: #{dqn_forward.1} parent=1 // pred_check
      _
    $region31: #{dqn_forward.1} parent=1 // pred_check_branch
      %74 = sbr.rel (0) target = $region33
    $region32: #{dqn_forward.1} parent=1 // pred_region
      %76 = dma.done [#allocation3], 2048
    $region33: #{dqn_forward.1} parent=1 // pred_fallthru
      _
    // Predicated region
    $region34: #{dqn_forward.1} parent=1 // pred_check
      _
    $region35: #{dqn_forward.1} parent=1 // pred_check_branch
      %78 = sbr.rel (0) target = $region37
    $region36: #{dqn_forward.1} parent=1 // pred_region
      %80 = dma.done [#allocation5], 512
    $region37: #{dqn_forward.1} parent=1 // pred_fallthru
      _
    // Predicated region
    $region38: #{dqn_forward.1} parent=1 // pred_check
      _
    $region39: #{dqn_forward.1} parent=1 // pred_check_branch
      %82 = sbr.rel (0) target = $region41
    $region40: #{dqn_forward.1} parent=1 // pred_region
      %84 = dma.done [#allocation5], 2048
    $region41: #{dqn_forward.1} parent=1 // pred_fallthru
      _
    // Predicated region
    $region42: #{dqn_forward.1} parent=1 // pred_check
      _
    $region43: #{dqn_forward.1} parent=1 // pred_check_branch
      %86 = sbr.rel (0) target = $region45
    $region44: #{dqn_forward.1} parent=1 // pred_region
      %88 = dma.done [#allocation8], 2048
    $region45: #{dqn_forward.1} parent=1 // pred_fallthru
      _
    %v89 = vld [vmem:[#allocation2] sm:$0xff]
    %v90 = vld [vmem:[#allocation2 + $0x8] sm:$0xff]
    %v91 = vld [vmem:[#allocation2 + $0x10] sm:$0xff]
    %v92 = vld [vmem:[#allocation2 + $0x18] sm:$0xff]
    %v93 = vld [vmem:[#allocation2 + $0x20] sm:$0xff]
    %v94 = vld [vmem:[#allocation2 + $0x28] sm:$0xff]
    %v95 = vld [vmem:[#allocation2 + $0x30] sm:$0xff]
    %v96 = vld [vmem:[#allocation2 + $0x38] sm:$0xff]
    %v97 = vld [vmem:[#allocation2 + $0x40] sm:$0xff]
    %v98 = vld [vmem:[#allocation2 + $0x48] sm:$0xff]
    %v99 = vld [vmem:[#allocation2 + $0x50] sm:$0xff]
    %v100 = vld [vmem:[#allocation2 + $0x58] sm:$0xff]
    %v101 = vld [vmem:[#allocation2 + $0x60] sm:$0xff]
    %v102 = vld [vmem:[#allocation2 + $0x68] sm:$0xff]
    %v103 = vld [vmem:[#allocation2 + $0x70] sm:$0xff]
    %v104 = vld [vmem:[#allocation2 + $0x78] sm:$0xff]
    %v105 = vld [vmem:[#allocation4] sm:$0xff]
    %v106 = vld [vmem:[#allocation4 + $0x8] sm:$0xff]
    %v107 = vld [vmem:[#allocation4 + $0x10] sm:$0xff]
    %v108 = vld [vmem:[#allocation4 + $0x18] sm:$0xff]
    %v109 = vld [vmem:[%s2] sm:$0x1]
    %v111 = vperm.slane %v109, 0
    %vm113 = vcmask 261120
    %v115 = vsel %vm113, %v89, 0
    %v118 = vsel %vm113, %v90, 0
    %v121 = vsel %vm113, %v91, 0
    %v124 = vsel %vm113, %v92, 0
    %v127 = vsel %vm113, %v93, 0
    %v130 = vsel %vm113, %v94, 0
    %v133 = vsel %vm113, %v95, 0
    %v136 = vsel %vm113, %v96, 0
    %v139 = vsel %vm113, %v97, 0
    %v142 = vsel %vm113, %v98, 0
    %v145 = vsel %vm113, %v99, 0
    %v148 = vsel %vm113, %v100, 0
    %v151 = vsel %vm113, %v101, 0
    %v154 = vsel %vm113, %v102, 0
    %v157 = vsel %vm113, %v103, 0
    %v160 = vsel %vm113, %v104, 0
    %162 = vmatpush.msra.mxu0 0.0
    %163 = vmatpush.msra.mxu0 0.0
    %164 = vmatpush.msra.mxu0 0.0
    %165 = vmatpush.msra.mxu0 0.0
    %166 = vmatpush.msra.mxu0 0.0
    %167 = vmatpush.msra.mxu0 0.0
    %168 = vmatpush.msra.mxu0 0.0
    %169 = vmatpush.msra.mxu0 0.0
    %170 = vmatpush.msra.mxu0 0.0
    %171 = vmatpush.msra.mxu0 0.0
    %172 = vmatpush.msra.mxu0 0.0
    %173 = vmatpush.msra.mxu0 0.0
    %174 = vmatpush.msra.mxu0 %v108
    %175 = vmatpush.msra.mxu0 %v107
    %176 = vmatpush.msra.mxu0 %v106
    %177 = vmatpush.msra.mxu0 %v105
    %178 = vmatmul.f32.gmra.mxu0 %v115
    %v179 = vpop.f32.mrf.mxu0
    %v180 = vadd.f32 %v111, %v179
    %181 = vmatmul.f32.gmra.mxu0 %v118
    %v182 = vpop.f32.mrf.mxu0
    %v183 = vadd.f32 %v111, %v182
    %184 = vmatmul.f32.gmra.mxu0 %v121
    %v185 = vpop.f32.mrf.mxu0
    %v186 = vadd.f32 %v111, %v185
    %187 = vmatmul.f32.gmra.mxu0 %v124
    %v188 = vpop.f32.mrf.mxu0
    %v189 = vadd.f32 %v111, %v188
    %190 = vmatmul.f32.gmra.mxu0 %v127
    %v191 = vpop.f32.mrf.mxu0
    %v192 = vadd.f32 %v111, %v191
    %193 = vmatmul.f32.gmra.mxu0 %v130
    %v194 = vpop.f32.mrf.mxu0
    %v195 = vadd.f32 %v111, %v194
    %196 = vmatmul.f32.gmra.mxu0 %v133
    %v197 = vpop.f32.mrf.mxu0
    %v198 = vadd.f32 %v111, %v197
    %199 = vmatmul.f32.gmra.mxu0 %v136
    %v200 = vpop.f32.mrf.mxu0
    %v201 = vadd.f32 %v111, %v200
    %202 = vmatmul.f32.gmra.mxu0 %v139
    %v203 = vpop.f32.mrf.mxu0
    %v204 = vadd.f32 %v111, %v203
    %205 = vmatmul.f32.gmra.mxu0 %v142
    %v206 = vpop.f32.mrf.mxu0
    %v207 = vadd.f32 %v111, %v206
    %208 = vmatmul.f32.gmra.mxu0 %v145
    %v209 = vpop.f32.mrf.mxu0
    %v210 = vadd.f32 %v111, %v209
    %211 = vmatmul.f32.gmra.mxu0 %v148
    %v212 = vpop.f32.mrf.mxu0
    %v213 = vadd.f32 %v111, %v212
    %214 = vmatmul.f32.gmra.mxu0 %v151
    %v215 = vpop.f32.mrf.mxu0
    %v216 = vadd.f32 %v111, %v215
    %217 = vmatmul.f32.gmra.mxu0 %v154
    %v218 = vpop.f32.mrf.mxu0
    %v219 = vadd.f32 %v111, %v218
    %220 = vmatmul.f32.gmra.mxu0 %v157
    %v221 = vpop.f32.mrf.mxu0
    %v222 = vadd.f32 %v111, %v221
    %223 = vmatmul.f32.gmra.mxu0 %v160
    %v224 = vpop.f32.mrf.mxu0
    %v225 = vadd.f32 %v111, %v224
    %226 = vdwg.mxu0
    %v227 = vmax.f32 %v180, 0.0
    %v228 = vmax.f32 %v183, 0.0
    %v229 = vmax.f32 %v186, 0.0
    %v230 = vmax.f32 %v189, 0.0
    %v231 = vmax.f32 %v192, 0.0
    %v232 = vmax.f32 %v195, 0.0
    %v233 = vmax.f32 %v198, 0.0
    %v234 = vmax.f32 %v201, 0.0
    %v235 = vmax.f32 %v204, 0.0
    %v236 = vmax.f32 %v207, 0.0
    %v237 = vmax.f32 %v210, 0.0
    %v238 = vmax.f32 %v213, 0.0
    %v239 = vmax.f32 %v216, 0.0
    %v240 = vmax.f32 %v219, 0.0
    %v241 = vmax.f32 %v222, 0.0
    %v242 = vmax.f32 %v225, 0.0
    %v243 = vld [vmem:[#allocation6] sm:$0xff]
    %v244 = vld [vmem:[#allocation6 + $0x8] sm:$0xff]
    %v245 = vld [vmem:[#allocation6 + $0x10] sm:$0xff]
    %v246 = vld [vmem:[#allocation6 + $0x18] sm:$0xff]
    %v247 = vld [vmem:[#allocation6 + $0x20] sm:$0xff]
    %v248 = vld [vmem:[#allocation6 + $0x28] sm:$0xff]
    %v249 = vld [vmem:[#allocation6 + $0x30] sm:$0xff]
    %v250 = vld [vmem:[#allocation6 + $0x38] sm:$0xff]
    %v251 = vld [vmem:[#allocation6 + $0x40] sm:$0xff]
    %v252 = vld [vmem:[#allocation6 + $0x48] sm:$0xff]
    %v253 = vld [vmem:[#allocation6 + $0x50] sm:$0xff]
    %v254 = vld [vmem:[#allocation6 + $0x58] sm:$0xff]
    %v255 = vld [vmem:[#allocation6 + $0x60] sm:$0xff]
    %v256 = vld [vmem:[#allocation6 + $0x68] sm:$0xff]
    %v257 = vld [vmem:[#allocation6 + $0x70] sm:$0xff]
    %v258 = vld [vmem:[#allocation6 + $0x78] sm:$0xff]
    %v259 = vld [vmem:[%s4] sm:$0x1]
    %v261 = vperm.slane %v259, 0
    %263 = vmatpush.msra.mxu0 %v258
    %264 = vmatpush.msra.mxu0 %v257
    %265 = vmatpush.msra.mxu0 %v256
    %266 = vmatpush.msra.mxu0 %v255
    %267 = vmatpush.msra.mxu0 %v254
    %268 = vmatpush.msra.mxu0 %v253
    %269 = vmatpush.msra.mxu0 %v252
    %270 = vmatpush.msra.mxu0 %v251
    %271 = vmatpush.msra.mxu0 %v250
    %272 = vmatpush.msra.mxu0 %v249
    %273 = vmatpush.msra.mxu0 %v248
    %274 = vmatpush.msra.mxu0 %v247
    %275 = vmatpush.msra.mxu0 %v246
    %276 = vmatpush.msra.mxu0 %v245
    %277 = vmatpush.msra.mxu0 %v244
    %278 = vmatpush.msra.mxu0 %v243
    %279 = vmatmul.f32.gmra.mxu0 %v227
    %v280 = vpop.f32.mrf.mxu0
    %v281 = vadd.f32 %v261, %v280
    %282 = vmatmul.f32.gmra.mxu0 %v228
    %v283 = vpop.f32.mrf.mxu0
    %v284 = vadd.f32 %v261, %v283
    %285 = vmatmul.f32.gmra.mxu0 %v229
    %v286 = vpop.f32.mrf.mxu0
    %v287 = vadd.f32 %v261, %v286
    %288 = vmatmul.f32.gmra.mxu0 %v230
    %v289 = vpop.f32.mrf.mxu0
    %v290 = vadd.f32 %v261, %v289
    %291 = vmatmul.f32.gmra.mxu0 %v231
    %v292 = vpop.f32.mrf.mxu0
    %v293 = vadd.f32 %v261, %v292
    %294 = vmatmul.f32.gmra.mxu0 %v232
    %v295 = vpop.f32.mrf.mxu0
    %v296 = vadd.f32 %v261, %v295
    %297 = vmatmul.f32.gmra.mxu0 %v233
    %v298 = vpop.f32.mrf.mxu0
    %v299 = vadd.f32 %v261, %v298
    %300 = vmatmul.f32.gmra.mxu0 %v234
    %v301 = vpop.f32.mrf.mxu0
    %v302 = vadd.f32 %v261, %v301
    %303 = vmatmul.f32.gmra.mxu0 %v235
    %v304 = vpop.f32.mrf.mxu0
    %v305 = vadd.f32 %v261, %v304
    %306 = vmatmul.f32.gmra.mxu0 %v236
    %v307 = vpop.f32.mrf.mxu0
    %v308 = vadd.f32 %v261, %v307
    %309 = vmatmul.f32.gmra.mxu0 %v237
    %v310 = vpop.f32.mrf.mxu0
    %v311 = vadd.f32 %v261, %v310
    %312 = vmatmul.f32.gmra.mxu0 %v238
    %v313 = vpop.f32.mrf.mxu0
    %v314 = vadd.f32 %v261, %v313
    %315 = vmatmul.f32.gmra.mxu0 %v239
    %v316 = vpop.f32.mrf.mxu0
    %v317 = vadd.f32 %v261, %v316
    %318 = vmatmul.f32.gmra.mxu0 %v240
    %v319 = vpop.f32.mrf.mxu0
    %v320 = vadd.f32 %v261, %v319
    %321 = vmatmul.f32.gmra.mxu0 %v241
    %v322 = vpop.f32.mrf.mxu0
    %v323 = vadd.f32 %v261, %v322
    %324 = vmatmul.f32.gmra.mxu0 %v242
    %v325 = vpop.f32.mrf.mxu0
    %v326 = vadd.f32 %v261, %v325
    %327 = vdwg.mxu0
    %v328 = vmax.f32 %v281, 0.0
    %v329 = vmax.f32 %v284, 0.0
    %v330 = vmax.f32 %v287, 0.0
    %v331 = vmax.f32 %v290, 0.0
    %v332 = vmax.f32 %v293, 0.0
    %v333 = vmax.f32 %v296, 0.0
    %v334 = vmax.f32 %v299, 0.0
    %v335 = vmax.f32 %v302, 0.0
    %v336 = vmax.f32 %v305, 0.0
    %v337 = vmax.f32 %v308, 0.0
    %v338 = vmax.f32 %v311, 0.0
    %v339 = vmax.f32 %v314, 0.0
    %v340 = vmax.f32 %v317, 0.0
    %v341 = vmax.f32 %v320, 0.0
    %v342 = vmax.f32 %v323, 0.0
    %v343 = vmax.f32 %v326, 0.0
    %v344 = vld [vmem:[#allocation7] sm:$0xff]
    %v345 = vld [vmem:[#allocation7 + $0x8] sm:$0xff]
    %v346 = vld [vmem:[#allocation7 + $0x10] sm:$0xff]
    %v347 = vld [vmem:[#allocation7 + $0x18] sm:$0xff]
    %v348 = vld [vmem:[#allocation7 + $0x20] sm:$0xff]
    %v349 = vld [vmem:[#allocation7 + $0x28] sm:$0xff]
    %v350 = vld [vmem:[#allocation7 + $0x30] sm:$0xff]
    %v351 = vld [vmem:[#allocation7 + $0x38] sm:$0xff]
    %v352 = vld [vmem:[#allocation7 + $0x40] sm:$0xff]
    %v353 = vld [vmem:[#allocation7 + $0x48] sm:$0xff]
    %v354 = vld [vmem:[#allocation7 + $0x50] sm:$0xff]
    %v355 = vld [vmem:[#allocation7 + $0x58] sm:$0xff]
    %v356 = vld [vmem:[#allocation7 + $0x60] sm:$0xff]
    %v357 = vld [vmem:[#allocation7 + $0x68] sm:$0xff]
    %v358 = vld [vmem:[#allocation7 + $0x70] sm:$0xff]
    %v359 = vld [vmem:[#allocation7 + $0x78] sm:$0xff]
    %v360 = vld [vmem:[%s6] sm:$0x1]
    %v362 = vperm.slane %v360, 0
    %364 = vmatpush.msra.mxu0 %v359
    %365 = vmatpush.msra.mxu0 %v358
    %366 = vmatpush.msra.mxu0 %v357
    %367 = vmatpush.msra.mxu0 %v356
    %368 = vmatpush.msra.mxu0 %v355
    %369 = vmatpush.msra.mxu0 %v354
    %370 = vmatpush.msra.mxu0 %v353
    %371 = vmatpush.msra.mxu0 %v352
    %372 = vmatpush.msra.mxu0 %v351
    %373 = vmatpush.msra.mxu0 %v350
    %374 = vmatpush.msra.mxu0 %v349
    %375 = vmatpush.msra.mxu0 %v348
    %376 = vmatpush.msra.mxu0 %v347
    %377 = vmatpush.msra.mxu0 %v346
    %378 = vmatpush.msra.mxu0 %v345
    %379 = vmatpush.msra.mxu0 %v344
    %380 = vmatmul.f32.gmra.mxu0 %v328
    %v381 = vpop.f32.mrf.mxu0
    %v382 = vadd.f32 %v362, %v381
    %383 = vmatmul.f32.gmra.mxu0 %v329
    %v384 = vpop.f32.mrf.mxu0
    %v385 = vadd.f32 %v362, %v384
    %386 = vmatmul.f32.gmra.mxu0 %v330
    %v387 = vpop.f32.mrf.mxu0
    %v388 = vadd.f32 %v362, %v387
    %389 = vmatmul.f32.gmra.mxu0 %v331
    %v390 = vpop.f32.mrf.mxu0
    %v391 = vadd.f32 %v362, %v390
    %392 = vmatmul.f32.gmra.mxu0 %v332
    %v393 = vpop.f32.mrf.mxu0
    %v394 = vadd.f32 %v362, %v393
    %395 = vmatmul.f32.gmra.mxu0 %v333
    %v396 = vpop.f32.mrf.mxu0
    %v397 = vadd.f32 %v362, %v396
    %398 = vmatmul.f32.gmra.mxu0 %v334
    %v399 = vpop.f32.mrf.mxu0
    %v400 = vadd.f32 %v362, %v399
    %401 = vmatmul.f32.gmra.mxu0 %v335
    %v402 = vpop.f32.mrf.mxu0
    %v403 = vadd.f32 %v362, %v402
    %404 = vmatmul.f32.gmra.mxu0 %v336
    %v405 = vpop.f32.mrf.mxu0
    %v406 = vadd.f32 %v362, %v405
    %407 = vmatmul.f32.gmra.mxu0 %v337
    %v408 = vpop.f32.mrf.mxu0
    %v409 = vadd.f32 %v362, %v408
    %410 = vmatmul.f32.gmra.mxu0 %v338
    %v411 = vpop.f32.mrf.mxu0
    %v412 = vadd.f32 %v362, %v411
    %413 = vmatmul.f32.gmra.mxu0 %v339
    %v414 = vpop.f32.mrf.mxu0
    %v415 = vadd.f32 %v362, %v414
    %416 = vmatmul.f32.gmra.mxu0 %v340
    %v417 = vpop.f32.mrf.mxu0
    %v418 = vadd.f32 %v362, %v417
    %419 = vmatmul.f32.gmra.mxu0 %v341
    %v420 = vpop.f32.mrf.mxu0
    %v421 = vadd.f32 %v362, %v420
    %422 = vmatmul.f32.gmra.mxu0 %v342
    %v423 = vpop.f32.mrf.mxu0
    %v424 = vadd.f32 %v362, %v423
    %425 = vmatmul.f32.gmra.mxu0 %v343
    %v426 = vpop.f32.mrf.mxu0
    %v427 = vadd.f32 %v362, %v426
    %428 = vdwg.mxu0
    %429 = vxpose.xlu0.b32.start [1/16] %v382, 128
    %430 = vxpose.xlu0.b32.cont [2/16] %v385, 128
    %431 = vxpose.xlu0.b32.cont [3/16] %v388, 128
    %432 = vxpose.xlu0.b32.cont [4/16] %v391, 128
    %433 = vxpose.xlu0.b32.cont [5/16] %v394, 128
    %434 = vxpose.xlu0.b32.cont [6/16] %v397, 128
    %435 = vxpose.xlu0.b32.cont [7/16] %v400, 128
    %436 = vxpose.xlu0.b32.cont [8/16] %v403, 128
    %437 = vxpose.xlu0.b32.cont [9/16] %v406, 128
    %438 = vxpose.xlu0.b32.cont [10/16] %v409, 128
    %439 = vxpose.xlu0.b32.cont [11/16] %v412, 128
    %440 = vxpose.xlu0.b32.cont [12/16] %v415, 128
    %441 = vxpose.xlu0.b32.cont [13/16] %v418, 128
    %442 = vxpose.xlu0.b32.cont [14/16] %v421, 128
    %443 = vxpose.xlu0.b32.cont [15/16] %v424, 128
    %444 = vxpose.xlu0.b32.end [16/16] %v427, 128
    %v445 = vpop.trf.xlu0
    %v446 = vpop.trf.xlu0
    %v447 = vpop.trf.xlu0
    %v448 = vpop.trf.xlu0
    %v449 = vpop.trf.xlu0
    %v450 = vpop.trf.xlu0
    %v451 = vpop.trf.xlu0
    %v452 = vpop.trf.xlu0
    %v453 = vpop.trf.xlu0
    %v454 = vpop.trf.xlu0
    %v455 = vpop.trf.xlu0
    %v456 = vpop.trf.xlu0
    %v457 = vpop.trf.xlu0
    %v458 = vpop.trf.xlu0
    %v459 = vpop.trf.xlu0
    %v460 = vpop.trf.xlu0
    %461 = vst [vmem:[%s7] sm:$0xff] %v445
    // Predicated region
    $region46: #{dqn_forward.1} parent=1 // pred_check
      _
    $region47: #{dqn_forward.1} parent=1 // pred_check_branch
      %463 = sbr.rel (0) target = $region49
    $region48: #{dqn_forward.1} parent=1 // pred_region
      _
    $region49: #{dqn_forward.1} parent=1 // pred_fallthru
      _
    // Predicated region
    $region50: #{dqn_forward.1} parent=1 // pred_check
      _
    $region51: #{dqn_forward.1} parent=1 // pred_check_branch
      %465 = sbr.rel (0) target = $region53
    $region52: #{dqn_forward.1} parent=1 // pred_region
      _
    $region53: #{dqn_forward.1} parent=1 // pred_fallthru
      _
    %466 = vsyncpa [#allocation3], 1
    %467 = vsyncpa [#allocation5], 1
    %468 = vsyncpa [#allocation8], 1

</llo_original>
